<compile_context>
chip_gen: v6e
topology: v6e:2x2x1
jax: 0.10.0
libtpu: 0.0.40
codegen_flags: <defaults>
</compile_context>

<pallas_src>
import jax
import jax.numpy as jnp
import numpy as np
from jax.experimental import pallas as pl
from jax.experimental.pallas import tpu as pltpu


def _round_up(n, m):
    return ((n + m - 1) // m) * m


def mlp_kernel(x_ref, wfc_ref, bfc_ref, wheads_ref, out_ref):
    """Fused MLP forward for one batch tile.

    x_ref      : (TB, I)   input tile
    wfc_ref    : (I, H)    fc weight
    bfc_ref    : (1, H)    fc bias
    wheads_ref : (H, O)    [land | shot | move] head weights concatenated
    out_ref    : (TB, O)   concatenated logits for this tile
    """
    x = x_ref[...]                                                  # (TB, I)
    h = jnp.dot(x, wfc_ref[...], preferred_element_type=jnp.float32)
    h = h + bfc_ref[...]                                            # broadcast once
    h = jnp.maximum(h, 0.0)                                         # ReLU
    out_ref[...] = jnp.dot(h, wheads_ref[...],
                           preferred_element_type=jnp.float32)


def mlp_forward(x, params):
    """x: (..., input_size); returns (land_logit, shot_logit, move_logit)."""
    wfc, bfc, w_land, w_shot, w_move = params
    *lead, I = x.shape
    x2 = x.reshape(-1, I).astype(jnp.float32)
    B = x2.shape[0]
    H = wfc.shape[1]

    # Fuse the three bias-free heads into one matmul (one lane-dense store).
    w_heads = jnp.concatenate([w_land, w_shot, w_move], axis=1)     # (H, O)
    O = w_heads.shape[1]
    n_land, n_shot, n_move = w_land.shape[1], w_shot.shape[1], w_move.shape[1]

    # Batch tile: multiple of 8 (sublane); cap at 128 rows per grid step.
    TB = 128 if B >= 128 else _round_up(B, 8)
    B_pad = _round_up(B, TB)
    if B_pad != B:
        x2 = jnp.pad(x2, ((0, B_pad - B), (0, 0)))

    grid = (B_pad // TB,)

    out = pl.pallas_call(
        mlp_kernel,
        out_shape=jax.ShapeDtypeStruct((B_pad, O), jnp.float32),
        grid_spec=pltpu.PrefetchScalarGridSpec(
            num_scalar_prefetch=0,
            grid=grid,
            in_specs=[
                pl.BlockSpec((TB, I), lambda i: (i, 0)),   # x tile
                pl.BlockSpec((I, H), lambda i: (0, 0)),    # W_fc (resident)
                pl.BlockSpec((1, H), lambda i: (0, 0)),    # b_fc (resident)
                pl.BlockSpec((H, O), lambda i: (0, 0)),    # W_heads (resident)
            ],
            out_specs=pl.BlockSpec((TB, O), lambda i: (i, 0)),
        ),
        compiler_params=pltpu.CompilerParams(
            dimension_semantics=("parallel",)),            # batch tiles independent
    )(x2, wfc, bfc, w_heads)

    out = out[:B]
    land = out[:, :n_land].reshape(*lead, n_land)
    shot = out[:, n_land:n_land + n_shot].reshape(*lead, n_shot)
    move = out[:, n_land + n_shot:].reshape(*lead, n_move)
    return land, shot, move


def mlp_reference(x, params):
    """Pure-JAX reference matching the PyTorch MLP.forward semantics."""
    wfc, bfc, w_land, w_shot, w_move = params
    h = jnp.maximum(x.astype(jnp.float32) @ wfc + bfc[0], 0.0)
    land = h @ w_land
    shot = h @ w_shot
    move = h @ w_move
    return land, shot, move


def init_params(key, input_size, hidden_size, shot_type_len):
    """PyTorch-default-style init: U(-1/sqrt(fan_in), 1/sqrt(fan_in)).

    Weights are stored (in, out); PyTorch stores (out, in), so real-weight
    import must transpose.
    """
    keys = jax.random.split(key, 5)
    k_fc = 1.0 / np.sqrt(input_size)
    k_h = 1.0 / np.sqrt(hidden_size)
    wfc = jax.random.uniform(keys[0], (input_size, hidden_size),
                             jnp.float32, -k_fc, k_fc)
    bfc = jax.random.uniform(keys[1], (1, hidden_size), jnp.float32, -k_fc, k_fc)
    w_land = jax.random.uniform(keys[2], (hidden_size, 2), jnp.float32, -k_h, k_h)
    w_shot = jax.random.uniform(keys[3], (hidden_size, shot_type_len),
                                jnp.float32, -k_h, k_h)
    w_move = jax.random.uniform(keys[4], (hidden_size, 2), jnp.float32, -k_h, k_h)
    return (wfc, bfc, w_land, w_shot, w_move)


if __name__ == "__main__":
    BATCH, INPUT, HIDDEN, SHOT_TYPES = 8, 16, 32, 10   # player_id_len unused in forward

    key = jax.random.PRNGKey(0)
    k_x, k_p = jax.random.split(key)
    x = jax.random.normal(k_x, (BATCH, INPUT), jnp.float32)
    params = init_params(k_p, INPUT, HIDDEN, SHOT_TYPES)

    land, shot, move = mlp_forward(x, params)
    land = jax.block_until_ready(land)
    shot = jax.block_until_ready(shot)
    move = jax.block_until_ready(move)

    land_r, shot_r, move_r = mlp_reference(x, params)
    np.testing.assert_allclose(np.asarray(land), np.asarray(land_r),
                               rtol=1e-5, atol=1e-5)
    np.testing.assert_allclose(np.asarray(shot), np.asarray(shot_r),
                               rtol=1e-5, atol=1e-5)
    np.testing.assert_allclose(np.asarray(move), np.asarray(move_r),
                               rtol=1e-5, atol=1e-5)

    print("KERNEL_OK")
</pallas_src>

<mosaic_0001>
module attributes {stable_mosaic.version = 11 : i64} {
  func.func @mlp_kernel(%arg0: i32, %arg1: memref<8x16xf32, #tpu.memory_space<vmem>>, %arg2: memref<16x32xf32, #tpu.memory_space<vmem>>, %arg3: memref<1x32xf32, #tpu.memory_space<vmem>>, %arg4: memref<32x14xf32, #tpu.memory_space<vmem>>, %arg5: memref<8x14xf32, #tpu.memory_space<vmem>>) attributes {dimension_semantics = [#tpu.dimension_semantics<parallel>], iteration_bounds = array<i64: 1>, scalar_prefetch = 0 : i64, scratch_operands = 0 : i64, tpu.core_type = #tpu.core_type<tc>, window_params = [{transform_indices = @transform_0, window_bounds = array<i64: 8, 16>}, {pipeline_mode = #tpu.pipeline_mode<synchronous>, transform_indices = @transform_1, window_bounds = array<i64: 16, 32>}, {pipeline_mode = #tpu.pipeline_mode<synchronous>, transform_indices = @transform_2, window_bounds = array<i64: 1, 32>}, {pipeline_mode = #tpu.pipeline_mode<synchronous>, transform_indices = @transform_3, window_bounds = array<i64: 32, 14>}, {transform_indices = @transform_4, window_bounds = array<i64: 8, 14>}]} {
    %c0 = arith.constant 0 : index
    %c0_0 = arith.constant 0 : index
    %0 = vector.load %arg1[%c0, %c0_0] : memref<8x16xf32, #tpu.memory_space<vmem>>, vector<8x16xf32>
    %c0_1 = arith.constant 0 : index
    %c0_2 = arith.constant 0 : index
    %1 = vector.load %arg2[%c0_1, %c0_2] : memref<16x32xf32, #tpu.memory_space<vmem>>, vector<16x32xf32>
    %cst = arith.constant dense<0.000000e+00> : vector<8x32xf32>
    %2 = tpu.matmul %0, %1, %cst {dimension_numbers = #tpu.dot_dimension_numbers<[1], [0], [0], [1], [0, 0, 1, 1], [], []>} : vector<8x16xf32>, vector<16x32xf32>, vector<8x32xf32> -> vector<8x32xf32>
    %c0_3 = arith.constant 0 : index
    %c0_4 = arith.constant 0 : index
    %3 = vector.load %arg3[%c0_3, %c0_4] : memref<1x32xf32, #tpu.memory_space<vmem>>, vector<1x32xf32>
    %4 = vector.broadcast %3 : vector<1x32xf32> to vector<8x32xf32>
    %5 = arith.addf %2, %4 : vector<8x32xf32>
    %cst_5 = arith.constant 0.000000e+00 : f32
    %6 = vector.broadcast %cst_5 : f32 to vector<8x32xf32>
    %7 = arith.maximumf %5, %6 : vector<8x32xf32>
    %c0_6 = arith.constant 0 : index
    %c0_7 = arith.constant 0 : index
    %8 = vector.load %arg4[%c0_6, %c0_7] : memref<32x14xf32, #tpu.memory_space<vmem>>, vector<32x14xf32>
    %cst_8 = arith.constant dense<0.000000e+00> : vector<8x14xf32>
    %9 = tpu.matmul %7, %8, %cst_8 {dimension_numbers = #tpu.dot_dimension_numbers<[1], [0], [0], [1], [0, 0, 1, 1], [], []>} : vector<8x32xf32>, vector<32x14xf32>, vector<8x14xf32> -> vector<8x14xf32>
    %c0_9 = arith.constant 0 : index
    %c0_10 = arith.constant 0 : index
    %10 = vector.load %arg5[%c0_9, %c0_10] : memref<8x14xf32, #tpu.memory_space<vmem>>, vector<8x14xf32>
    tpu.vector_store %arg5[%c0_9, %c0_10], %9 {strides = array<i32>} : memref<8x14xf32, #tpu.memory_space<vmem>>, vector<8x14xf32>,
    return
  }
  func.func @transform_0(%arg0: i32) -> (i32, i32) {
    %c0_i32 = arith.constant 0 : i32
    %c0_i32_0 = arith.constant 0 : i32
    return %arg0, %c0_i32 : i32, i32
  }
  func.func @transform_1(%arg0: i32) -> (i32, i32) {
    %c0_i32 = arith.constant 0 : i32
    %c0_i32_0 = arith.constant 0 : i32
    %c0_i32_1 = arith.constant 0 : i32
    return %c0_i32, %c0_i32_0 : i32, i32
  }
  func.func @transform_2(%arg0: i32) -> (i32, i32) {
    %c0_i32 = arith.constant 0 : i32
    %c0_i32_0 = arith.constant 0 : i32
    %c0_i32_1 = arith.constant 0 : i32
    return %c0_i32, %c0_i32_0 : i32, i32
  }
  func.func @transform_3(%arg0: i32) -> (i32, i32) {
    %c0_i32 = arith.constant 0 : i32
    %c0_i32_0 = arith.constant 0 : i32
    %c0_i32_1 = arith.constant 0 : i32
    return %c0_i32, %c0_i32_0 : i32, i32
  }
  func.func @transform_4(%arg0: i32) -> (i32, i32) {
    %c0_i32 = arith.constant 0 : i32
    %c0_i32_0 = arith.constant 0 : i32
    return %arg0, %c0_i32 : i32, i32
  }
}

</mosaic_0001>

<llo_original>
// kernel: tpu_custom_call.1
$region0: #{tpu_custom_call.1}
  #allocation0 [shape = 'u32[]', space=smem, size = 0x4, offset = 0x4, fixed_abs, tag = 'smem constant byte address 0x4 - core index']
  #allocation1 [shape = 'u32[144,128]{1,0:T(1,128)}', space=vmem, size = 0x12000, scoped, tag = 'internal scratch']
  %s0 = inlined_call_operand.vmem [shape: f32[8,16], index: 0, kind: input, shape index: {}]
  %s1 = inlined_call_operand.vmem [shape: f32[16,32], index: 1, kind: input, shape index: {}]
  %s2 = inlined_call_operand.vmem [shape: f32[1,32], index: 2, kind: input, shape index: {}]
  %s3 = inlined_call_operand.vmem [shape: f32[32,14], index: 3, kind: input, shape index: {}]
  %s4 = inlined_call_operand.hbm [shape: f32[8,14], index: 4, kind: output, shape index: {}]
  %s5 = sld [smem:[#allocation0]]
  $region26: #{tpu_custom_call.1} parent=0
    _
  %s7 = ssub.s32 1, %s5
  %s8 = scalar_select 0, %s7, %s5
  $region1: #{tpu_custom_call.1} parent=0
    #allocation2 [shape = 'u8[4096]{0}', space=vmem, size = 0x1000, scoped, tag = 'output window, operand 0, single buffered']
    #allocation3 [shape = 's32[1]{0}', space=sflag, size = 0x4, scoped, tag = 'scoped memory for tpu_custom_call.1']
    %9 = vsyncpa [#allocation3], 0
    // Predicated region
    $region2: #{tpu_custom_call.1} parent=1 // pred_check
      _
    $region3: #{tpu_custom_call.1} parent=1 // pred_check_branch
      %11 = sbr.rel (0) target = $region5
    $region4: #{tpu_custom_call.1} parent=1 // pred_region
      _
    $region5: #{tpu_custom_call.1} parent=1 // pred_fallthru
      _
    // Predicated region
    $region6: #{tpu_custom_call.1} parent=1 // pred_check
      _
    $region7: #{tpu_custom_call.1} parent=1 // pred_check_branch
      %13 = sbr.rel (0) target = $region9
    $region8: #{tpu_custom_call.1} parent=1 // pred_region
      _
    $region9: #{tpu_custom_call.1} parent=1 // pred_fallthru
      _
    // Predicated region
    $region10: #{tpu_custom_call.1} parent=1 // pred_check
      _
    $region11: #{tpu_custom_call.1} parent=1 // pred_check_branch
      %15 = sbr.rel (0) target = $region13
    $region12: #{tpu_custom_call.1} parent=1 // pred_region
      _
    $region13: #{tpu_custom_call.1} parent=1 // pred_fallthru
      _
    // Predicated region
    $region14: #{tpu_custom_call.1} parent=1 // pred_check
      _
    $region15: #{tpu_custom_call.1} parent=1 // pred_check_branch
      %17 = sbr.rel (0) target = $region17
    $region16: #{tpu_custom_call.1} parent=1 // pred_region
      _
    $region17: #{tpu_custom_call.1} parent=1 // pred_fallthru
      _
    %v18 = vld [vmem:[%s0] sm:$0xff]
    %v19 = vld [vmem:[%s1] sm:$0xff]
    %v20 = vld [vmem:[%s1 + $0x8] sm:$0xff]
    %v21 = vld [vmem:[%s2] sm:$0x1]
    %v23 = vlaneseq
    %v24 = vshrl.u32 %v23, 7
    %v25 = vsub.s32 0, %v24
    %v26 = vrot.slane %v21, %v25
    %vm28 = vcmask 130048
    %v30 = vsel %vm28, %v18, 0
    %32 = vmatprep.subr.mxu0 0.0
    %33 = vmatpush1.msra.mxu0 0.0
    %34 = vmatprep.subr.mxu0 0.0
    %35 = vmatpush1.msra.mxu0 0.0
    %36 = vmatprep.subr.mxu0 0.0
    %37 = vmatpush1.msra.mxu0 0.0
    %38 = vmatprep.subr.mxu0 0.0
    %39 = vmatpush1.msra.mxu0 0.0
    %40 = vmatprep.subr.mxu0 0.0
    %41 = vmatpush1.msra.mxu0 0.0
    %42 = vmatprep.subr.mxu0 0.0
    %43 = vmatpush1.msra.mxu0 0.0
    %44 = vmatprep.subr.mxu0 0.0
    %45 = vmatpush1.msra.mxu0 0.0
    %46 = vmatprep.subr.mxu0 0.0
    %47 = vmatpush1.msra.mxu0 0.0
    %48 = vmatprep.subr.mxu0 0.0
    %49 = vmatpush1.msra.mxu0 0.0
    %50 = vmatprep.subr.mxu0 0.0
    %51 = vmatpush1.msra.mxu0 0.0
    %52 = vmatprep.subr.mxu0 0.0
    %53 = vmatpush1.msra.mxu0 0.0
    %54 = vmatprep.subr.mxu0 0.0
    %55 = vmatpush1.msra.mxu0 0.0
    %56 = vmatprep.subr.mxu0 0.0
    %57 = vmatpush1.msra.mxu0 0.0
    %58 = vmatprep.subr.mxu0 0.0
    %59 = vmatpush1.msra.mxu0 0.0
    %60 = vmatprep.subr.mxu0 0.0
    %61 = vmatpush1.msra.mxu0 %v20
    %62 = vmatprep.subr.mxu0 0.0
    %63 = vmatpush1.msra.mxu0 %v19
    %64 = vmatprep.subr.mxu0 0.0
    %65 = vmatpush2.msra.mxu0 0.0
    %66 = vmatprep.subr.mxu0 0.0
    %67 = vmatpush2.msra.mxu0 0.0
    %68 = vmatprep.subr.mxu0 0.0
    %69 = vmatpush2.msra.mxu0 0.0
    %70 = vmatprep.subr.mxu0 0.0
    %71 = vmatpush2.msra.mxu0 0.0
    %72 = vmatprep.subr.mxu0 0.0
    %73 = vmatpush2.msra.mxu0 0.0
    %74 = vmatprep.subr.mxu0 0.0
    %75 = vmatpush2.msra.mxu0 0.0
    %76 = vmatprep.subr.mxu0 0.0
    %77 = vmatpush2.msra.mxu0 0.0
    %78 = vmatprep.subr.mxu0 0.0
    %79 = vmatpush2.msra.mxu0 0.0
    %80 = vmatprep.subr.mxu0 0.0
    %81 = vmatpush2.msra.mxu0 0.0
    %82 = vmatprep.subr.mxu0 0.0
    %83 = vmatpush2.msra.mxu0 0.0
    %84 = vmatprep.subr.mxu0 0.0
    %85 = vmatpush2.msra.mxu0 0.0
    %86 = vmatprep.subr.mxu0 0.0
    %87 = vmatpush2.msra.mxu0 0.0
    %88 = vmatprep.subr.mxu0 0.0
    %89 = vmatpush2.msra.mxu0 0.0
    %90 = vmatprep.subr.mxu0 0.0
    %91 = vmatpush2.msra.mxu0 0.0
    %92 = vmatprep.subr.mxu0 0.0
    %93 = vmatpush2.msra.mxu0 0.0
    %94 = vmatprep.subr.mxu0 0.0
    %95 = vmatpush2.msra.mxu0 0.0
    %96 = vmatprep.mubr.f32.mxu0 0.0
    %97 = vmatmul.mubr.f32.gmra.mxu0 %v30
    %v98 = vpop.f32.mrf.mxu0
    %v99 = vadd.f32 %v26, %v98
    %v100 = vpop.f32.mrf.mxu0
    %101 = vdwg.mxu0
    %v102 = vmax.f32 %v99, 0.0
    %v103 = vld [vmem:[%s3] sm:$0xff]
    %v104 = vld [vmem:[%s3 + $0x8] sm:$0xff]
    %v105 = vld [vmem:[%s3 + $0x10] sm:$0xff]
    %v106 = vld [vmem:[%s3 + $0x18] sm:$0xff]
    %vm107 = vcmask 261120
    %v109 = vsel %vm107, %v102, 0
    %111 = vmatprep.subr.mxu0 0.0
    %112 = vmatpush1.msra.mxu0 0.0
    %113 = vmatprep.subr.mxu0 0.0
    %114 = vmatpush1.msra.mxu0 0.0
    %115 = vmatprep.subr.mxu0 0.0
    %116 = vmatpush1.msra.mxu0 0.0
    %117 = vmatprep.subr.mxu0 0.0
    %118 = vmatpush1.msra.mxu0 0.0
    %119 = vmatprep.subr.mxu0 0.0
    %120 = vmatpush1.msra.mxu0 0.0
    %121 = vmatprep.subr.mxu0 0.0
    %122 = vmatpush1.msra.mxu0 0.0
    %123 = vmatprep.subr.mxu0 0.0
    %124 = vmatpush1.msra.mxu0 0.0
    %125 = vmatprep.subr.mxu0 0.0
    %126 = vmatpush1.msra.mxu0 0.0
    %127 = vmatprep.subr.mxu0 0.0
    %128 = vmatpush1.msra.mxu0 0.0
    %129 = vmatprep.subr.mxu0 0.0
    %130 = vmatpush1.msra.mxu0 0.0
    %131 = vmatprep.subr.mxu0 0.0
    %132 = vmatpush1.msra.mxu0 0.0
    %133 = vmatprep.subr.mxu0 0.0
    %134 = vmatpush1.msra.mxu0 0.0
    %135 = vmatprep.subr.mxu0 0.0
    %136 = vmatpush1.msra.mxu0 %v106
    %137 = vmatprep.subr.mxu0 0.0
    %138 = vmatpush1.msra.mxu0 %v105
    %139 = vmatprep.subr.mxu0 0.0
    %140 = vmatpush1.msra.mxu0 %v104
    %141 = vmatprep.subr.mxu0 0.0
    %142 = vmatpush1.msra.mxu0 %v103
    %143 = vmatprep.subr.mxu0 0.0
    %144 = vmatpush2.msra.mxu0 0.0
    %145 = vmatprep.subr.mxu0 0.0
    %146 = vmatpush2.msra.mxu0 0.0
    %147 = vmatprep.subr.mxu0 0.0
    %148 = vmatpush2.msra.mxu0 0.0
    %149 = vmatprep.subr.mxu0 0.0
    %150 = vmatpush2.msra.mxu0 0.0
    %151 = vmatprep.subr.mxu0 0.0
    %152 = vmatpush2.msra.mxu0 0.0
    %153 = vmatprep.subr.mxu0 0.0
    %154 = vmatpush2.msra.mxu0 0.0
    %155 = vmatprep.subr.mxu0 0.0
    %156 = vmatpush2.msra.mxu0 0.0
    %157 = vmatprep.subr.mxu0 0.0
    %158 = vmatpush2.msra.mxu0 0.0
    %159 = vmatprep.subr.mxu0 0.0
    %160 = vmatpush2.msra.mxu0 0.0
    %161 = vmatprep.subr.mxu0 0.0
    %162 = vmatpush2.msra.mxu0 0.0
    %163 = vmatprep.subr.mxu0 0.0
    %164 = vmatpush2.msra.mxu0 0.0
    %165 = vmatprep.subr.mxu0 0.0
    %166 = vmatpush2.msra.mxu0 0.0
    %167 = vmatprep.subr.mxu0 0.0
    %168 = vmatpush2.msra.mxu0 0.0
    %169 = vmatprep.subr.mxu0 0.0
    %170 = vmatpush2.msra.mxu0 0.0
    %171 = vmatprep.subr.mxu0 0.0
    %172 = vmatpush2.msra.mxu0 0.0
    %173 = vmatprep.subr.mxu0 0.0
    %174 = vmatpush2.msra.mxu0 0.0
    %175 = vmatprep.mubr.f32.mxu0 0.0
    %176 = vmatmul.mubr.f32.gmra.mxu0 %v109
    %v177 = vpop.f32.mrf.mxu0
    %v178 = vadd.f32 0.0, %v177
    %v179 = vpop.f32.mrf.mxu0
    %180 = vdwg.mxu0
    %vm181 = vcmask 113664
    %182 = vst.msk [vmem:[#allocation2] sm:$0xff] %vm181, %v178
    // Predicated region
    $region18: #{tpu_custom_call.1} parent=1 // pred_check
      _
    $region19: #{tpu_custom_call.1} parent=1 // pred_check_branch
      %184 = sbr.rel (0) target = $region21
    $region20: #{tpu_custom_call.1} parent=1 // pred_region
      %s186 = ssub.s32 128, 128
      %187 = vsyncadd [#allocation3], %s186
      %s189 = sshll.u32 [#allocation2], 4
      %s190 = int_to_ptr.vmem [resolvable:$true] %s189
      %192 = dma.vmem_to_hbm [thread:$0]  %s190, 128, %s4, [#allocation3]
    $region21: #{tpu_custom_call.1} parent=1 // pred_fallthru
      _
    // Predicated region
    $region22: #{tpu_custom_call.1} parent=1 // pred_check
      _
    $region23: #{tpu_custom_call.1} parent=1 // pred_check_branch
      %194 = sbr.rel (0) target = $region25
    $region24: #{tpu_custom_call.1} parent=1 // pred_region
      %195 = dma.done [#allocation3], 128
    $region25: #{tpu_custom_call.1} parent=1 // pred_fallthru
      _
    %196 = vsyncpa [#allocation3], 1

</llo_original>
